<compile_context>
chip_gen: v6e
topology: v6e:2x2x1
jax: 0.10.0
libtpu: 0.0.40
codegen_flags: <defaults>
</compile_context>

<pallas_src>
import jax
import jax.numpy as jnp
from jax.experimental import pallas as pl
from jax.experimental.pallas import tpu as pltpu


def _round_up(v, m):
    return (v + m - 1) // m * m


def _make_kernel(C, lane_tile, hw, hw_pad, inv_hw):
    need_mask = hw_pad != hw

    def kernel(x_ref, w1_ref, w2_ref, a_ref, out_ref, sum_acc, max_acc):
        # x_ref:   (1, C, lane_tile)   current (batch, HW-tile) block
        # w1_ref:  (C_r, C)            resident weights (PyTorch layout)
        # w2_ref:  (C, C_r)
        # a_ref:   (1,)                PReLU slope in SMEM
        # out_ref: (1, C, 1)
        # sum_acc / max_acc: (C, lane_tile) f32 scratch accumulators
        k = pl.program_id(1)
        last_k = pl.num_programs(1) - 1

        @pl.when(k == 0)
        def _init():
            sum_acc[...] = jnp.zeros_like(sum_acc)
            max_acc[...] = jnp.full_like(max_acc, -jnp.inf)

        x = x_ref[0].astype(jnp.float32)                       # (C, lane_tile)
        if need_mask:
            col = k * lane_tile + jax.lax.broadcasted_iota(
                jnp.int32, (C, lane_tile), 1)
            x_max = jnp.where(col < hw, x, -jnp.inf)           # ignore padding
        else:
            x_max = x

        # Elementwise (VALU) accumulation; padded columns are zero for the sum.
        sum_acc[...] += x
        max_acc[...] = jnp.maximum(max_acc[...], x_max)

        @pl.when(k == last_k)
        def _finalize():
            # One cross-lane reduce per batch, then the tiny shared MLP.
            avg = jnp.sum(sum_acc[...], axis=-1, keepdims=True) * inv_hw  # (C,1)
            mx = jnp.max(max_acc[...], axis=-1, keepdims=True)            # (C,1)
            pooled = jnp.concatenate([avg, mx], axis=1)                   # (C,2)

            w1 = w1_ref[...].astype(jnp.float32)                          # (C_r,C)
            w2 = w2_ref[...].astype(jnp.float32)                          # (C,C_r)
            a = a_ref[0]

            h = jnp.dot(w1, pooled, preferred_element_type=jnp.float32)   # (C_r,2)
            h = jnp.where(h > 0, h, a * h)                                # PReLU
            y = jnp.dot(w2, h, preferred_element_type=jnp.float32)        # (C,2)
            att = jax.nn.sigmoid(y[:, 0:1] + y[:, 1:2])                   # (C,1)
            out_ref[...] = att.reshape(1, C, 1).astype(out_ref.dtype)

    return kernel


def channel_attention(x, w1, w2, prelu_a, *, max_lane_tile=1024):
    """x: (N, C, H, W); w1: (C//r, C); w2: (C, C//r); prelu_a: scalar slope."""
    N, C, H, W = x.shape
    C_r = w1.shape[0]
    HW = H * W

    # Lane tile: multiple of 128, capped at max_lane_tile; pad HW up to it.
    lane_tile = min(max_lane_tile, _round_up(HW, 128))
    HW_pad = _round_up(HW, lane_tile)
    num_k = HW_pad // lane_tile

    x_flat = x.reshape(N, C, HW)
    if HW_pad != HW:
        x_flat = jnp.pad(x_flat, ((0, 0), (0, 0), (0, HW_pad - HW)))

    a = jnp.asarray(prelu_a, jnp.float32).reshape(1)
    inv_hw = 1.0 / float(HW)

    kernel = _make_kernel(C, lane_tile, HW, HW_pad, inv_hw)

    out = pl.pallas_call(
        kernel,
        out_shape=jax.ShapeDtypeStruct((N, C, 1), x.dtype),
        grid_spec=pltpu.PrefetchScalarGridSpec(
            num_scalar_prefetch=0,
            grid=(N, num_k),
            in_specs=[
                pl.BlockSpec((1, C, lane_tile), lambda b, k: (b, 0, k)),   # x tile
                pl.BlockSpec((C_r, C), lambda b, k: (0, 0)),               # w1
                pl.BlockSpec((C, C_r), lambda b, k: (0, 0)),               # w2
                pl.BlockSpec(memory_space=pltpu.MemorySpace.SMEM),         # slope
            ],
            out_specs=pl.BlockSpec((1, C, 1), lambda b, k: (b, 0, 0)),
            scratch_shapes=[
                pltpu.VMEM((C, lane_tile), jnp.float32),  # running sum
                pltpu.VMEM((C, lane_tile), jnp.float32),  # running max
            ],
        ),
        compiler_params=pltpu.CompilerParams(
            dimension_semantics=("parallel", "arbitrary"),
        ),
    )(x_flat, w1, w2, a)

    return out.reshape(N, C, 1, 1)


def _reference(x, w1, w2, prelu_a):
    # Pure-JAX reference mirroring the PyTorch module.
    avg = jnp.mean(x, axis=(2, 3))                       # (N, C)
    mx = jnp.max(x, axis=(2, 3))                         # (N, C)

    def mlp(p):
        h = p @ w1.T
        h = jnp.where(h > 0, h, prelu_a * h)
        return h @ w2.T

    return jax.nn.sigmoid(mlp(avg) + mlp(mx)).reshape(x.shape[0], x.shape[1], 1, 1)


if __name__ == "__main__":
    key = jax.random.PRNGKey(0)
    k_x, k_w1, k_w2, k_x2 = jax.random.split(key, 4)

    N, C, H, W = 2, 4, 16, 16
    ratio = 2
    C_r = C // ratio

    x = jax.random.normal(k_x, (N, C, H, W), dtype=jnp.float32)
    # Deterministic synthetic weights (shapes match nn.Conv2d(C, C_r, 1) etc.)
    w1 = jax.random.normal(k_w1, (C_r, C), dtype=jnp.float32) * 0.1
    w2 = jax.random.normal(k_w2, (C, C_r), dtype=jnp.float32) * 0.1
    prelu_a = 0.25  # PyTorch PReLU default init (single shared parameter)

    out = channel_attention(x, w1, w2, prelu_a)
    out = jax.block_until_ready(out)
    ref = _reference(x, w1, w2, prelu_a)
    assert out.shape == (N, C, 1, 1)
    assert jnp.allclose(out, ref, atol=1e-5, rtol=1e-5)

    # Second tiny check exercising the non-multiple-of-tile (masked) path.
    x2 = jax.random.normal(k_x2, (N, C, 15, 15), dtype=jnp.float32)
    out2 = jax.block_until_ready(channel_attention(x2, w1, w2, prelu_a))
    ref2 = _reference(x2, w1, w2, prelu_a)
    assert jnp.allclose(out2, ref2, atol=1e-5, rtol=1e-5)

    print("KERNEL_OK")
</pallas_src>

<mosaic_0001>
module attributes {stable_mosaic.version = 11 : i64} {
  func.func @kernel(%arg0: i32, %arg1: i32, %arg2: memref<1x4x256xf32, #tpu.memory_space<vmem>>, %arg3: memref<2x4xf32, #tpu.memory_space<vmem>>, %arg4: memref<4x2xf32, #tpu.memory_space<vmem>>, %arg5: memref<1xf32, #tpu.memory_space<smem>>, %arg6: memref<1x4x1xf32, #tpu.memory_space<vmem>>, %arg7: memref<4x256xf32, #tpu.memory_space<vmem>>, %arg8: memref<4x256xf32, #tpu.memory_space<vmem>>) attributes {dimension_semantics = [#tpu.dimension_semantics<parallel>, #tpu.dimension_semantics<arbitrary>], iteration_bounds = array<i64: 2, 1>, scalar_prefetch = 0 : i64, scratch_operands = 2 : i64, tpu.core_type = #tpu.core_type<tc>, window_params = [{transform_indices = @transform_0, window_bounds = array<i64: 1, 4, 256>}, {pipeline_mode = #tpu.pipeline_mode<synchronous>, transform_indices = @transform_1, window_bounds = array<i64: 2, 4>}, {pipeline_mode = #tpu.pipeline_mode<synchronous>, transform_indices = @transform_2, window_bounds = array<i64: 4, 2>}, {transform_indices = @transform_3, window_bounds = array<i64: 1>}, {transform_indices = @transform_4, window_bounds = array<i64: 1, 4, 1>}]} {
    %c0_i32 = arith.constant 0 : i32
    %0 = arith.cmpi eq, %arg1, %c0_i32 : i32
    %1 = arith.extui %0 : i1 to i32
    %c0_i32_0 = arith.constant 0 : i32
    %2 = arith.cmpi ne, %1, %c0_i32_0 : i32
    scf.if %2 {
      %cst = arith.constant 0.000000e+00 : f32
      %14 = vector.broadcast %cst : f32 to vector<4x256xf32>
      %c0_13 = arith.constant 0 : index
      %c0_14 = arith.constant 0 : index
      %15 = vector.load %arg7[%c0_13, %c0_14] : memref<4x256xf32, #tpu.memory_space<vmem>>, vector<4x256xf32>
      tpu.vector_store %arg7[%c0_13, %c0_14], %14 {strides = array<i32>} : memref<4x256xf32, #tpu.memory_space<vmem>>, vector<4x256xf32>,
      %cst_15 = arith.constant 0xFF800000 : f32
      %16 = vector.broadcast %cst_15 : f32 to vector<4x256xf32>
      %c0_16 = arith.constant 0 : index
      %c0_17 = arith.constant 0 : index
      %17 = vector.load %arg8[%c0_16, %c0_17] : memref<4x256xf32, #tpu.memory_space<vmem>>, vector<4x256xf32>
      tpu.vector_store %arg8[%c0_16, %c0_17], %16 {strides = array<i32>} : memref<4x256xf32, #tpu.memory_space<vmem>>, vector<4x256xf32>,
    } else {
    }
    %c0 = arith.constant 0 : index
    %c0_1 = arith.constant 0 : index
    %c0_2 = arith.constant 0 : index
    %3 = vector.load %arg2[%c0, %c0_1, %c0_2] : memref<1x4x256xf32, #tpu.memory_space<vmem>>, vector<1x4x256xf32>
    %4 = vector.shape_cast %3 : vector<1x4x256xf32> to vector<4x256xf32>
    %c0_3 = arith.constant 0 : index
    %c0_4 = arith.constant 0 : index
    %5 = vector.load %arg7[%c0_3, %c0_4] : memref<4x256xf32, #tpu.memory_space<vmem>>, vector<4x256xf32>
    %6 = arith.addf %5, %4 : vector<4x256xf32>
    %c0_5 = arith.constant 0 : index
    %c0_6 = arith.constant 0 : index
    %7 = vector.load %arg7[%c0_5, %c0_6] : memref<4x256xf32, #tpu.memory_space<vmem>>, vector<4x256xf32>
    tpu.vector_store %arg7[%c0_5, %c0_6], %6 {strides = array<i32>} : memref<4x256xf32, #tpu.memory_space<vmem>>, vector<4x256xf32>,
    %c0_7 = arith.constant 0 : index
    %c0_8 = arith.constant 0 : index
    %8 = vector.load %arg8[%c0_7, %c0_8] : memref<4x256xf32, #tpu.memory_space<vmem>>, vector<4x256xf32>
    %9 = arith.maximumf %8, %4 : vector<4x256xf32>
    %c0_9 = arith.constant 0 : index
    %c0_10 = arith.constant 0 : index
    %10 = vector.load %arg8[%c0_9, %c0_10] : memref<4x256xf32, #tpu.memory_space<vmem>>, vector<4x256xf32>
    tpu.vector_store %arg8[%c0_9, %c0_10], %9 {strides = array<i32>} : memref<4x256xf32, #tpu.memory_space<vmem>>, vector<4x256xf32>,
    %c0_i32_11 = arith.constant 0 : i32
    %11 = arith.cmpi eq, %arg1, %c0_i32_11 : i32
    %12 = arith.extui %11 : i1 to i32
    %c0_i32_12 = arith.constant 0 : i32
    %13 = arith.cmpi ne, %12, %c0_i32_12 : i32
    scf.if %13 {
      %c0_13 = arith.constant 0 : index
      %c0_14 = arith.constant 0 : index
      %14 = vector.load %arg7[%c0_13, %c0_14] : memref<4x256xf32, #tpu.memory_space<vmem>>, vector<4x256xf32>
      %cst = arith.constant dense<0.000000e+00> : vector<4xf32>
      %15 = vector.multi_reduction <add>, %14, %cst [1] : vector<4x256xf32> to vector<4xf32>
      %16 = vector.shape_cast %15 : vector<4xf32> to vector<4x1xf32>
      %cst_15 = arith.constant 3.906250e-03 : f32
      %17 = vector.broadcast %cst_15 : f32 to vector<4x1xf32>
      %18 = arith.mulf %16, %17 : vector<4x1xf32>
      %c0_16 = arith.constant 0 : index
      %c0_17 = arith.constant 0 : index
      %19 = vector.load %arg8[%c0_16, %c0_17] : memref<4x256xf32, #tpu.memory_space<vmem>>, vector<4x256xf32>
      %cst_18 = arith.constant dense<0xFF800000> : vector<4xf32>
      %20 = vector.multi_reduction <maximumf>, %19, %cst_18 [1] : vector<4x256xf32> to vector<4xf32>
      %21 = vector.shape_cast %20 : vector<4xf32> to vector<4x1xf32>
      %22 = tpu.concatenate %18, %21 in 1 : vector<4x1xf32>, vector<4x1xf32> -> vector<4x2xf32>
      %c0_19 = arith.constant 0 : index
      %c0_20 = arith.constant 0 : index
      %23 = vector.load %arg3[%c0_19, %c0_20] : memref<2x4xf32, #tpu.memory_space<vmem>>, vector<2x4xf32>
      %c0_21 = arith.constant 0 : index
      %c0_22 = arith.constant 0 : index
      %24 = vector.load %arg4[%c0_21, %c0_22] : memref<4x2xf32, #tpu.memory_space<vmem>>, vector<4x2xf32>
      %c0_23 = arith.constant 0 : index
      %25 = memref.load %arg5[%c0_23] : memref<1xf32, #tpu.memory_space<smem>>
      %cst_24 = arith.constant dense<0.000000e+00> : vector<2x2xf32>
      %26 = tpu.matmul %23, %22, %cst_24 {dimension_numbers = #tpu.dot_dimension_numbers<[1], [0], [0], [1], [0, 0, 1, 1], [], []>} : vector<2x4xf32>, vector<4x2xf32>, vector<2x2xf32> -> vector<2x2xf32>
      %cst_25 = arith.constant 0.000000e+00 : f32
      %27 = vector.broadcast %cst_25 : f32 to vector<2x2xf32>
      %28 = arith.cmpf ogt, %26, %27 : vector<2x2xf32>
      %29 = vector.broadcast %25 : f32 to vector<2x2xf32>
      %30 = arith.mulf %29, %26 : vector<2x2xf32>
      %31 = arith.select %28, %26, %30 : vector<2x2xi1>, vector<2x2xf32>
      %cst_26 = arith.constant dense<0.000000e+00> : vector<4x2xf32>
      %32 = tpu.matmul %24, %31, %cst_26 {dimension_numbers = #tpu.dot_dimension_numbers<[1], [0], [0], [1], [0, 0, 1, 1], [], []>} : vector<4x2xf32>, vector<2x2xf32>, vector<4x2xf32> -> vector<4x2xf32>
      %33 = vector.extract_strided_slice %32 {offsets = [0, 0], sizes = [4, 1], strides = [1, 1]} : vector<4x2xf32> to vector<4x1xf32>
      %34 = vector.extract_strided_slice %32 {offsets = [0, 1], sizes = [4, 1], strides = [1, 1]} : vector<4x2xf32> to vector<4x1xf32>
      %35 = arith.addf %33, %34 : vector<4x1xf32>
      %36 = arith.negf %35 : vector<4x1xf32>
      %37 = math.exp %36 : vector<4x1xf32>
      %cst_27 = arith.constant 1.000000e+00 : f32
      %38 = vector.broadcast %cst_27 : f32 to vector<4x1xf32>
      %39 = arith.addf %38, %37 : vector<4x1xf32>
      %40 = arith.divf %38, %39 : vector<4x1xf32>
      %41 = vector.shape_cast %40 : vector<4x1xf32> to vector<1x4x1xf32>
      %c0_28 = arith.constant 0 : index
      %c0_29 = arith.constant 0 : index
      %c0_30 = arith.constant 0 : index
      %42 = vector.load %arg6[%c0_28, %c0_29, %c0_30] : memref<1x4x1xf32, #tpu.memory_space<vmem>>, vector<1x4x1xf32>
      tpu.vector_store %arg6[%c0_28, %c0_29, %c0_30], %41 {strides = array<i32>} : memref<1x4x1xf32, #tpu.memory_space<vmem>>, vector<1x4x1xf32>,
    } else {
    }
    return
  }
  func.func @transform_0(%arg0: i32, %arg1: i32) -> (i32, i32, i32) {
    %c0_i32 = arith.constant 0 : i32
    %c0_i32_0 = arith.constant 0 : i32
    return %arg0, %c0_i32, %arg1 : i32, i32, i32
  }
  func.func @transform_1(%arg0: i32, %arg1: i32) -> (i32, i32) {
    %c0_i32 = arith.constant 0 : i32
    %c0_i32_0 = arith.constant 0 : i32
    %c0_i32_1 = arith.constant 0 : i32
    return %c0_i32, %c0_i32_0 : i32, i32
  }
  func.func @transform_2(%arg0: i32, %arg1: i32) -> (i32, i32) {
    %c0_i32 = arith.constant 0 : i32
    %c0_i32_0 = arith.constant 0 : i32
    %c0_i32_1 = arith.constant 0 : i32
    return %c0_i32, %c0_i32_0 : i32, i32
  }
  func.func @transform_3(%arg0: i32, %arg1: i32) -> i32 {
    %c0_i32 = arith.constant 0 : i32
    %c0_i32_0 = arith.constant 0 : i32
    return %c0_i32 : i32
  }
  func.func @transform_4(%arg0: i32, %arg1: i32) -> (i32, i32, i32) {
    %c0_i32 = arith.constant 0 : i32
    %c0_i32_0 = arith.constant 0 : i32
    %c0_i32_1 = arith.constant 0 : i32
    return %arg0, %c0_i32, %c0_i32_0 : i32, i32, i32
  }
}

</mosaic_0001>

<llo_original>
// kernel: tpu_custom_call.1
$region0: #{tpu_custom_call.1}
  #allocation0 [shape = 'u32[]', space=smem, size = 0x4, offset = 0x4, fixed_abs, tag = 'smem constant byte address 0x4 - core index']
  #allocation1 [shape = 'u32[144,128]{1,0:T(1,128)}', space=vmem, size = 0x12000, scoped, tag = 'internal scratch']
  #allocation2 [shape = 'f32[4,256]{1,0:T(4,128)}', space=vmem, size = 0x1000, scoped, tag = 'scratch operand']
  #allocation3 [shape = 'f32[4,256]{1,0:T(4,128)}', space=vmem, size = 0x1000, scoped, tag = 'scratch operand']
  #allocation4 [shape = 'f32[1]{0:T(128)S(6)}', space=smem, size = 0x200, scoped, tag = 'scoped memory for tpu_custom_call.1']
  %s0 = inlined_call_operand.hbm [shape: f32[2,4,256], index: 0, kind: input, shape index: {}]
  %s1 = inlined_call_operand.vmem [shape: f32[2,4], index: 1, kind: input, shape index: {}]
  %s2 = inlined_call_operand.vmem [shape: f32[4,2], index: 2, kind: input, shape index: {}]
  %s3 = inlined_call_operand.<no memory space> [shape: f32[1], index: 3, kind: input, shape index: {}]
  %s4 = inlined_call_operand.vmem [shape: f32[2,4,1], index: 4, kind: output, shape index: {}]
  %s5 = sld [smem:[#allocation0]]
  $region61: #{tpu_custom_call.1} parent=0
    _
  %s7 = ssub.s32 1, %s5
  %s8 = scalar_select 0, %s7, %s5
  %9 = sst [smem:[#allocation4]] %s3
  $region1: #{tpu_custom_call.1} parent=0
    #allocation5 [shape = 'u8[8192]{0}', space=vmem, size = 0x2000, scoped, tag = 'input window, operand 0']
    #allocation6 [shape = 's32[2]{0}', space=sflag, size = 0x8, scoped, tag = 'scoped memory for tpu_custom_call.1']
    %10 = vsyncpa [#allocation6], 0
    %s11 = scalar_lea.sflag [#allocation6], 1
    %12 = vsyncpa %s11, 0
    loop: start=0, step=1, limit=4
    $region2: #{tpu_custom_call.1} parent=1 // loop_pre_header
      _
    $region3: #{tpu_custom_call.1} parent=1 // loop_header
      %s14 = sphi 0, %s18
      %p15 = scmp.ge.s32.totalorder %s14, 4
      %s21 = sphi 0, %s33
      %s22 = sphi 0, %s29
      %s23 = sphi 0, %s21
      %s24 = sphi 0, %s22
      %s25 = sphi 0, %s23
      %s26 = sphi 0, %s24
      %s38 = sphi 0, %s40
      %s41 = sphi 0, %s38
      %s42 = sphi 0, %s41
      %s58 = sphi 0, %s42
      %s62 = sphi 0, %s62
      %s64 = sphi 0, %s62
      %s65 = sphi 0, %s64
      %s79 = sphi 0, %s65
      %s83 = sphi 0, %s83
      %s85 = sphi 0, %s83
      %s86 = sphi 0, %s85
      %s100 = sphi 0, %s86
      %s104 = sphi 0, %s104
      %s106 = sphi 0, %s104
      %s107 = sphi 0, %s106
      %s121 = sphi 0, %s107
      %s127 = sphi 0, %s129
      %s130 = sphi 0, %s127
      %s131 = sphi 0, %s130
      %s147 = sphi 0, %s131
    $region4: #{tpu_custom_call.1} parent=1 // loop_header_branch
      %17 = sbr.rel (%p15) target = $region8
    $region5: #{tpu_custom_call.1} parent=1 // loop_body
      %s19 = ssub.s32 %s14, 1
      %s20 = ssub.s32 %s14, 2
      %s27 = sadd.s32 1, %s22
      %p28 = scmp.ge.s32.totalorder %s27, 1
      %s29 = scalar_select %p28, 0, %s27
      %s30 = sadd.s32 1, %s21
      %s31 = scalar_select %p28, %s30, %s21
      %p32 = scmp.ge.s32.totalorder %s31, 2
      %s33 = scalar_select %p32, 0, %s31
      %s34 = ssub.s32 %s21, %s33
      %s35 = ssub.s32 %s22, %s29
      %s36 = sor.u32 %s34, %s35
      %p37 = scmp.eq.s32.totalorder %s36, 0
      %s39 = sadd.s32 %s38, 1
      %s40 = scalar_select %p37, %s38, %s39
      %p43 = pneg %p37
      %p44 = scmp.eq.s32.totalorder %s14, 1
      %p45 = por %p43, %p44
      %p46 = scmp.ne.s32.totalorder %s38, %s41
      %p47 = scmp.eq.s32.totalorder %s14, 0
      %p48 = por %p46, %p47
      %p49 = scmp.ne.s32.totalorder %s38, %s41
      %p50 = scmp.eq.s32.totalorder %s19, 1
      %p51 = por %p49, %p50
      %p52 = scmp.ne.s32.totalorder %s41, %s42
      %p53 = scmp.eq.s32.totalorder %s19, 0
      %p54 = por %p52, %p53
      %p55 = scmp.ne.s32.totalorder %s41, %s42
      %p56 = scmp.eq.s32.totalorder %s20, 1
      %p57 = por %p55, %p56
      %p59 = scmp.ne.s32.totalorder %s42, %s58
      %p60 = scmp.eq.s32.totalorder %s20, 0
      %p61 = por %p59, %p60
      %s63 = sadd.s32 %s62, 1
      %p66 = scmp.eq.s32.totalorder %s14, 1
      %p67 = scmp.ne.s32.totalorder %s62, %s64
      %p68 = scmp.eq.s32.totalorder %s14, 0
      %p69 = por %p67, %p68
      %p70 = scmp.ne.s32.totalorder %s62, %s64
      %p71 = scmp.eq.s32.totalorder %s19, 1
      %p72 = por %p70, %p71
      %p73 = scmp.ne.s32.totalorder %s64, %s65
      %p74 = scmp.eq.s32.totalorder %s19, 0
      %p75 = por %p73, %p74
      %p76 = scmp.ne.s32.totalorder %s64, %s65
      %p77 = scmp.eq.s32.totalorder %s20, 1
      %p78 = por %p76, %p77
      %p80 = scmp.ne.s32.totalorder %s65, %s79
      %p81 = scmp.eq.s32.totalorder %s20, 0
      %p82 = por %p80, %p81
      %s84 = sadd.s32 %s83, 1
      %p87 = scmp.eq.s32.totalorder %s14, 1
      %p88 = scmp.ne.s32.totalorder %s83, %s85
      %p89 = scmp.eq.s32.totalorder %s14, 0
      %p90 = por %p88, %p89
      %p91 = scmp.ne.s32.totalorder %s83, %s85
      %p92 = scmp.eq.s32.totalorder %s19, 1
      %p93 = por %p91, %p92
      %p94 = scmp.ne.s32.totalorder %s85, %s86
      %p95 = scmp.eq.s32.totalorder %s19, 0
      %p96 = por %p94, %p95
      %p97 = scmp.ne.s32.totalorder %s85, %s86
      %p98 = scmp.eq.s32.totalorder %s20, 1
      %p99 = por %p97, %p98
      %p101 = scmp.ne.s32.totalorder %s86, %s100
      %p102 = scmp.eq.s32.totalorder %s20, 0
      %p103 = por %p101, %p102
      %s105 = sadd.s32 %s104, 1
      %p108 = scmp.eq.s32.totalorder %s14, 1
      %p109 = scmp.ne.s32.totalorder %s104, %s106
      %p110 = scmp.eq.s32.totalorder %s14, 0
      %p111 = por %p109, %p110
      %p112 = scmp.ne.s32.totalorder %s104, %s106
      %p113 = scmp.eq.s32.totalorder %s19, 1
      %p114 = por %p112, %p113
      %p115 = scmp.ne.s32.totalorder %s106, %s107
      %p116 = scmp.eq.s32.totalorder %s19, 0
      %p117 = por %p115, %p116
      %p118 = scmp.ne.s32.totalorder %s106, %s107
      %p119 = scmp.eq.s32.totalorder %s20, 1
      %p120 = por %p118, %p119
      %p122 = scmp.ne.s32.totalorder %s107, %s121
      %p123 = scmp.eq.s32.totalorder %s20, 0
      %p124 = por %p122, %p123
      %s125 = ssub.s32 %s21, %s33
      %p126 = scmp.eq.s32.totalorder %s125, 0
      %s128 = sadd.s32 %s127, 1
      %s129 = scalar_select %p126, %s127, %s128
      %p132 = pneg %p126
      %p133 = scmp.eq.s32.totalorder %s14, 1
      %p134 = por %p132, %p133
      %p135 = scmp.ne.s32.totalorder %s127, %s130
      %p136 = scmp.eq.s32.totalorder %s14, 0
      %p137 = por %p135, %p136
      %p138 = scmp.ne.s32.totalorder %s127, %s130
      %p139 = scmp.eq.s32.totalorder %s19, 1
      %p140 = por %p138, %p139
      %p141 = scmp.ne.s32.totalorder %s130, %s131
      %p142 = scmp.eq.s32.totalorder %s19, 0
      %p143 = por %p141, %p142
      %p144 = scmp.ne.s32.totalorder %s130, %s131
      %p145 = scmp.eq.s32.totalorder %s20, 1
      %p146 = por %p144, %p145
      %p148 = scmp.ne.s32.totalorder %s131, %s147
      %p149 = scmp.eq.s32.totalorder %s20, 0
      %p150 = por %p148, %p149
      %p151 = scmp.le.s32.totalorder 1, %s14
      %p152 = scmp.lt.s32.totalorder %s14, 3
      %p153 = pnand %p151, %p152
      %p154 = pneg %p153
      // Predicated region
      $region9: #{tpu_custom_call.1} parent=5 // pred_check
        _
      $region10: #{tpu_custom_call.1} parent=5 // pred_check_branch
        %156 = sbr.rel (%p153) target = $region12
      $region11: #{tpu_custom_call.1} parent=5 // pred_region
        %s157 = ssub.s32 %s14, 1
        // Predicated region
        $region13: #{tpu_custom_call.1} parent=11 // pred_check
          %p158 = pneg %p75
        $region14: #{tpu_custom_call.1} parent=11 // pred_check_branch
          %160 = sbr.rel (%p158) target = $region16
        $region15: #{tpu_custom_call.1} parent=11 // pred_region
          _
        $region16: #{tpu_custom_call.1} parent=11 // pred_fallthru
          _
        // Predicated region
        $region17: #{tpu_custom_call.1} parent=11 // pred_check
          %p161 = pneg %p96
        $region18: #{tpu_custom_call.1} parent=11 // pred_check_branch
          %163 = sbr.rel (%p161) target = $region20
        $region19: #{tpu_custom_call.1} parent=11 // pred_region
          _
        $region20: #{tpu_custom_call.1} parent=11 // pred_fallthru
          _
        // Predicated region
        $region21: #{tpu_custom_call.1} parent=11 // pred_check
          %p164 = pneg %p117
        $region22: #{tpu_custom_call.1} parent=11 // pred_check_branch
          %166 = sbr.rel (%p164) target = $region24
        $region23: #{tpu_custom_call.1} parent=11 // pred_region
          _
        $region24: #{tpu_custom_call.1} parent=11 // pred_fallthru
          _
      $region12: #{tpu_custom_call.1} parent=5 // pred_fallthru
        _
      %p167 = scmp.lt.s32.totalorder %s14, 2
      // Predicated region
      $region25: #{tpu_custom_call.1} parent=5 // pred_check
        %p168 = pneg %p167
      $region26: #{tpu_custom_call.1} parent=5 // pred_check_branch
        %170 = sbr.rel (%p168) target = $region28
      $region27: #{tpu_custom_call.1} parent=5 // pred_region
        // Predicated region
        $region29: #{tpu_custom_call.1} parent=27 // pred_check
          %p171 = pneg %p48
        $region30: #{tpu_custom_call.1} parent=27 // pred_check_branch
          %173 = sbr.rel (%p171) target = $region32
        $region31: #{tpu_custom_call.1} parent=27 // pred_region
          %s174 = sand.u32 %s38, 1
          %s175 = scalar_lea.sflag [#allocation6], %s174
          %s176 = sand.u32 %s38, 1
          %s177 = smul.addr %s176, 8
          %s178 = scalar_lea.vmem [#allocation5], %s177
          %s179 = smul.u32 2, %s22
          %s181 = ssub.s32 128, 128
          %182 = vsyncadd %s175, %s181
          %s183 = smul.addr %s21, 2
          %s184 = sadd.s32 %s179, %s183
          %s185 = smul.addr %s184, 64
          %s186 = scalar_lea.hbm %s0, %s185
          %s188 = sshll.u32 %s178, 4
          %s189 = int_to_ptr.vmem [resolvable:$true] %s188
          %191 = dma.hbm_to_vmem [thread:$0]  %s186, 128, %s189, %s175
        $region32: #{tpu_custom_call.1} parent=27 // pred_fallthru
          _
      $region28: #{tpu_custom_call.1} parent=5 // pred_fallthru
        _
      %p192 = scmp.le.s32.totalorder 1, %s14
      %p193 = scmp.lt.s32.totalorder %s14, 3
      %p194 = pnand %p192, %p193
      %p195 = pneg %p194
      // Predicated region
      $region33: #{tpu_custom_call.1} parent=5 // pred_check
        _
      $region34: #{tpu_custom_call.1} parent=5 // pred_check_branch
        %197 = sbr.rel (%p194) target = $region36
      $region35: #{tpu_custom_call.1} parent=5 // pred_region
        %s198 = ssub.s32 %s14, 1
        %s199 = sand.u32 %s41, 1
        %s200 = scalar_lea.sflag [#allocation6], %s199
        %s201 = sand.u32 %s41, 1
        %s202 = smul.addr %s201, 8
        %s203 = scalar_lea.vmem [#allocation5], %s202
        // Predicated region
        $region37: #{tpu_custom_call.1} parent=35 // pred_check
          %p204 = pneg %p54
        $region38: #{tpu_custom_call.1} parent=35 // pred_check_branch
          %206 = sbr.rel (%p204) target = $region40
        $region39: #{tpu_custom_call.1} parent=35 // pred_region
          %207 = dma.done %s200, 128
        $region40: #{tpu_custom_call.1} parent=35 // pred_fallthru
          _
        %s208 = sand.u32 %s41, 1
        %s209 = scalar_lea.sflag [#allocation6], %s208
        %s210 = sand.u32 %s41, 1
        %s211 = smul.addr %s210, 8
        %s212 = scalar_lea.vmem [#allocation5], %s211
        %p213 = pneg %p54
        %p214 = pneg %p51
        %p215 = pneg %p75
        %p216 = pneg %p72
        %p217 = pneg %p96
        %p218 = pneg %p93
        %p219 = pneg %p117
        %p220 = pneg %p114
        %p221 = pneg %p143
        %p222 = pneg %p140
        %p223 = scmp.lt.s32.totalorder %s23, 1
        %s224 = scalar_select %p223, %s23, 1
        %s225 = smul.addr %s224, 4
        %s226 = scalar_lea.vmem %s4, %s225
        %s227 = smul.u32 2, %s24
        %p228 = scmp.lt.s32.totalorder %s23, 1
        %s229 = scalar_select %p228, %s23, 1
        %s230 = smul.addr %s229, 4
        %s231 = scalar_lea.vmem %s4, %s230
        %p232 = scmp.eq.s32.totalorder %s24, 0
        // Predicated region
        $region41: #{tpu_custom_call.1} parent=35 // pred_check
          %p233 = pneg %p232
        $region42: #{tpu_custom_call.1} parent=35 // pred_check_branch
          %235 = sbr.rel (%p233) target = $region44
        $region43: #{tpu_custom_call.1} parent=35 // pred_region
          %236 = vst [vmem:[#allocation2] sm:$0xff] 0.0
          %237 = vst [vmem:[#allocation3] sm:$0xff] -inf
        $region44: #{tpu_custom_call.1} parent=35 // pred_fallthru
          _
        %v238 = vld [vmem:[%s203] sm:$0xff]
        %v239 = vld [vmem:[#allocation2] sm:$0xff]
        %v240 = vadd.f32 %v239, %v238
        %241 = vst [vmem:[#allocation2] sm:$0xff] %v240
        %v242 = vld [vmem:[#allocation3] sm:$0xff]
        %v243 = vmax.f32 %v242, %v238
        %244 = vst [vmem:[#allocation3] sm:$0xff] %v243
        // Predicated region
        $region45: #{tpu_custom_call.1} parent=35 // pred_check
          %p245 = pneg %p232
        $region46: #{tpu_custom_call.1} parent=35 // pred_check_branch
          %247 = sbr.rel (%p245) target = $region48
        $region47: #{tpu_custom_call.1} parent=35 // pred_region
          %v248 = vld [vmem:[#allocation2] sm:$0xff]
          %v250 = vcombine.high %v248, %v248
          %vm252 = vcmask 1043456
          %v253 = vsel %vm252, %v248, 0.0
          %v254 = vsel %vm252, %v250, 0.0
          %v255 = vadd.f32 %v253, %v254
          %256 = vadd.xlane.f32.xlu0 %v255
          %v257 = vpop.xlane.xlu0 %256
          %v258 = vmul.f32 %v257, 0.00390625
          %v259 = vld [vmem:[#allocation3] sm:$0xff]
          %v261 = vcombine.high %v259, %v259
          %v263 = vsel %vm252, %v259, -inf
          %v264 = vsel %vm252, %v261, -inf
          %v265 = vmax.f32 %v263, %v264
          %266 = vmax.xlane.f32.xlu0 %v265
          %v267 = vpop.xlane.xlu0 %266
          %vm268 = vcmask 7168
          %v269 = vsel %vm268, %v258, %v267
          %v270 = vld [vmem:[%s1] sm:$0x3]
          %v271 = vld [vmem:[%s2] sm:$0xf]
          %s272 = sld [smem:[#allocation4]]
          %vm273 = vcmask 31744
          %v275 = vsel %vm273, %v270, 0
          %v278 = vsel %vm252, %v269, 0
          %280 = vmatprep.subr.mxu0 0.0
          %281 = vmatpush1.msra.mxu0 0.0
          %282 = vmatprep.subr.mxu0 0.0
          %283 = vmatpush1.msra.mxu0 0.0
          %284 = vmatprep.subr.mxu0 0.0
          %285 = vmatpush1.msra.mxu0 0.0
          %286 = vmatprep.subr.mxu0 0.0
          %287 = vmatpush1.msra.mxu0 0.0
          %288 = vmatprep.subr.mxu0 0.0
          %289 = vmatpush1.msra.mxu0 0.0
          %290 = vmatprep.subr.mxu0 0.0
          %291 = vmatpush1.msra.mxu0 0.0
          %292 = vmatprep.subr.mxu0 0.0
          %293 = vmatpush1.msra.mxu0 0.0
          %294 = vmatprep.subr.mxu0 0.0
          %295 = vmatpush1.msra.mxu0 0.0
          %296 = vmatprep.subr.mxu0 0.0
          %297 = vmatpush1.msra.mxu0 0.0
          %298 = vmatprep.subr.mxu0 0.0
          %299 = vmatpush1.msra.mxu0 0.0
          %300 = vmatprep.subr.mxu0 0.0
          %301 = vmatpush1.msra.mxu0 0.0
          %302 = vmatprep.subr.mxu0 0.0
          %303 = vmatpush1.msra.mxu0 0.0
          %304 = vmatprep.subr.mxu0 0.0
          %305 = vmatpush1.msra.mxu0 0.0
          %306 = vmatprep.subr.mxu0 0.0
          %307 = vmatpush1.msra.mxu0 0.0
          %308 = vmatprep.subr.mxu0 0.0
          %309 = vmatpush1.msra.mxu0 0.0
          %310 = vmatprep.subr.mxu0 0.0
          %311 = vmatpush1.msra.mxu0 %v278
          %312 = vmatprep.subr.mxu0 0.0
          %313 = vmatpush2.msra.mxu0 0.0
          %314 = vmatprep.subr.mxu0 0.0
          %315 = vmatpush2.msra.mxu0 0.0
          %316 = vmatprep.subr.mxu0 0.0
          %317 = vmatpush2.msra.mxu0 0.0
          %318 = vmatprep.subr.mxu0 0.0
          %319 = vmatpush2.msra.mxu0 0.0
          %320 = vmatprep.subr.mxu0 0.0
          %321 = vmatpush2.msra.mxu0 0.0
          %322 = vmatprep.subr.mxu0 0.0
          %323 = vmatpush2.msra.mxu0 0.0
          %324 = vmatprep.subr.mxu0 0.0
          %325 = vmatpush2.msra.mxu0 0.0
          %326 = vmatprep.subr.mxu0 0.0
          %327 = vmatpush2.msra.mxu0 0.0
          %328 = vmatprep.subr.mxu0 0.0
          %329 = vmatpush2.msra.mxu0 0.0
          %330 = vmatprep.subr.mxu0 0.0
          %331 = vmatpush2.msra.mxu0 0.0
          %332 = vmatprep.subr.mxu0 0.0
          %333 = vmatpush2.msra.mxu0 0.0
          %334 = vmatprep.subr.mxu0 0.0
          %335 = vmatpush2.msra.mxu0 0.0
          %336 = vmatprep.subr.mxu0 0.0
          %337 = vmatpush2.msra.mxu0 0.0
          %338 = vmatprep.subr.mxu0 0.0
          %339 = vmatpush2.msra.mxu0 0.0
          %340 = vmatprep.subr.mxu0 0.0
          %341 = vmatpush2.msra.mxu0 0.0
          %342 = vmatprep.subr.mxu0 0.0
          %343 = vmatpush2.msra.mxu0 0.0
          %344 = vmatprep.mubr.f32.mxu0 0.0
          %345 = vmatmul.mubr.f32.gmra.mxu0 %v275
          %v346 = vpop.f32.mrf.mxu0
          %v347 = vadd.f32 0.0, %v346
          %v348 = vpop.f32.mrf.mxu0
          %349 = vdwg.mxu0
          %vm350 = vcmp.gt.f32.partialorder %v347, 0.0
          %v351 = vstv %s272
          %v352 = vmul.f32 %v351, %v347
          %v353 = vsel %vm350, %v347, %v352
          %vm354 = vcmask 15360
          %v356 = vsel %vm354, %v271, 0
          %vm358 = vcmask 1041408
          %v360 = vsel %vm358, %v353, 0
          %362 = vmatprep.subr.mxu0 0.0
          %363 = vmatpush1.msra.mxu0 0.0
          %364 = vmatprep.subr.mxu0 0.0
          %365 = vmatpush1.msra.mxu0 0.0
          %366 = vmatprep.subr.mxu0 0.0
          %367 = vmatpush1.msra.mxu0 0.0
          %368 = vmatprep.subr.mxu0 0.0
          %369 = vmatpush1.msra.mxu0 0.0
          %370 = vmatprep.subr.mxu0 0.0
          %371 = vmatpush1.msra.mxu0 0.0
          %372 = vmatprep.subr.mxu0 0.0
          %373 = vmatpush1.msra.mxu0 0.0
          %374 = vmatprep.subr.mxu0 0.0
          %375 = vmatpush1.msra.mxu0 0.0
          %376 = vmatprep.subr.mxu0 0.0
          %377 = vmatpush1.msra.mxu0 0.0
          %378 = vmatprep.subr.mxu0 0.0
          %379 = vmatpush1.msra.mxu0 0.0
          %380 = vmatprep.subr.mxu0 0.0
          %381 = vmatpush1.msra.mxu0 0.0
          %382 = vmatprep.subr.mxu0 0.0
          %383 = vmatpush1.msra.mxu0 0.0
          %384 = vmatprep.subr.mxu0 0.0
          %385 = vmatpush1.msra.mxu0 0.0
          %386 = vmatprep.subr.mxu0 0.0
          %387 = vmatpush1.msra.mxu0 0.0
          %388 = vmatprep.subr.mxu0 0.0
          %389 = vmatpush1.msra.mxu0 0.0
          %390 = vmatprep.subr.mxu0 0.0
          %391 = vmatpush1.msra.mxu0 0.0
          %392 = vmatprep.subr.mxu0 0.0
          %393 = vmatpush1.msra.mxu0 %v360
          %394 = vmatprep.subr.mxu0 0.0
          %395 = vmatpush2.msra.mxu0 0.0
          %396 = vmatprep.subr.mxu0 0.0
          %397 = vmatpush2.msra.mxu0 0.0
          %398 = vmatprep.subr.mxu0 0.0
          %399 = vmatpush2.msra.mxu0 0.0
          %400 = vmatprep.subr.mxu0 0.0
          %401 = vmatpush2.msra.mxu0 0.0
          %402 = vmatprep.subr.mxu0 0.0
          %403 = vmatpush2.msra.mxu0 0.0
          %404 = vmatprep.subr.mxu0 0.0
          %405 = vmatpush2.msra.mxu0 0.0
          %406 = vmatprep.subr.mxu0 0.0
          %407 = vmatpush2.msra.mxu0 0.0
          %408 = vmatprep.subr.mxu0 0.0
          %409 = vmatpush2.msra.mxu0 0.0
          %410 = vmatprep.subr.mxu0 0.0
          %411 = vmatpush2.msra.mxu0 0.0
          %412 = vmatprep.subr.mxu0 0.0
          %413 = vmatpush2.msra.mxu0 0.0
          %414 = vmatprep.subr.mxu0 0.0
          %415 = vmatpush2.msra.mxu0 0.0
          %416 = vmatprep.subr.mxu0 0.0
          %417 = vmatpush2.msra.mxu0 0.0
          %418 = vmatprep.subr.mxu0 0.0
          %419 = vmatpush2.msra.mxu0 0.0
          %420 = vmatprep.subr.mxu0 0.0
          %421 = vmatpush2.msra.mxu0 0.0
          %422 = vmatprep.subr.mxu0 0.0
          %423 = vmatpush2.msra.mxu0 0.0
          %424 = vmatprep.subr.mxu0 0.0
          %425 = vmatpush2.msra.mxu0 0.0
          %426 = vmatprep.mubr.f32.mxu0 0.0
          %427 = vmatmul.mubr.f32.gmra.mxu0 %v356
          %v428 = vpop.f32.mrf.mxu0
          %v429 = vadd.f32 0.0, %v428
          %v430 = vpop.f32.mrf.mxu0
          %431 = vdwg.mxu0
          %433 = vrot.lane.b32.xlu0 %v429, 127
          %v434 = vpop.permute.xlu0 %433
          %v436 = vadd.f32 %v429, %v434
          %v437 = vxor.u32 %v436, 2147483648
          %v438 = vmul.f32 %v437, 1.442695
          %v439 = vpow.pop %v438
          %v440 = vadd.f32 %v439, 1.0
          %v441 = vrcp.pop %v440
          %v442 = vmul.f32 1.0, %v441
          %vm443 = vcmask 3072
          %444 = vst.msk [vmem:[%s231] sm:$0xf] %vm443, %v442
        $region48: #{tpu_custom_call.1} parent=35 // pred_fallthru
          _
        %p445 = scmp.lt.s32.totalorder %s23, 1
        %s446 = scalar_select %p445, %s23, 1
        %s447 = smul.addr %s446, 4
        %s448 = scalar_lea.vmem %s4, %s447
        // Predicated region
        $region49: #{tpu_custom_call.1} parent=35 // pred_check
          %p449 = pneg %p140
        $region50: #{tpu_custom_call.1} parent=35 // pred_check_branch
          %451 = sbr.rel (%p449) target = $region52
        $region51: #{tpu_custom_call.1} parent=35 // pred_region
          _
        $region52: #{tpu_custom_call.1} parent=35 // pred_fallthru
          _
      $region36: #{tpu_custom_call.1} parent=5 // pred_fallthru
        _
      %p452 = scmp.le.s32.totalorder 2, %s14
      // Predicated region
      $region53: #{tpu_custom_call.1} parent=5 // pred_check
        %p453 = pneg %p452
      $region54: #{tpu_custom_call.1} parent=5 // pred_check_branch
        %455 = sbr.rel (%p453) target = $region56
      $region55: #{tpu_custom_call.1} parent=5 // pred_region
        %s456 = ssub.s32 %s14, 2
        // Predicated region
        $region57: #{tpu_custom_call.1} parent=55 // pred_check
          %p457 = pneg %p146
        $region58: #{tpu_custom_call.1} parent=55 // pred_check_branch
          %459 = sbr.rel (%p457) target = $region60
        $region59: #{tpu_custom_call.1} parent=55 // pred_region
          %p460 = scmp.lt.s32.totalorder %s25, 1
          %s461 = scalar_select %p460, %s25, 1
          %s462 = smul.addr %s461, 4
          %s463 = scalar_lea.vmem %s4, %s462
        $region60: #{tpu_custom_call.1} parent=55 // pred_fallthru
          _
      $region56: #{tpu_custom_call.1} parent=5 // pred_fallthru
        _
    $region6: #{tpu_custom_call.1} parent=1 // loop_footer
      %s18 = sadd.s32 1, %s14
    $region7: #{tpu_custom_call.1} parent=1 // loop_footer_branch
      %13 = sbr.rel target = $region3
    $region8: #{tpu_custom_call.1} parent=1 // loop_exit
      _
    %464 = vsyncpa [#allocation6], 1
    %s465 = scalar_lea.sflag [#allocation6], 1
    %466 = vsyncpa %s465, 1

</llo_original>
